<compile_context>
chip_gen: v7x
topology: tpu7x:2x2x1
jax: 0.10.0
libtpu: 0.0.40
codegen_flags: <defaults>
</compile_context>

<pallas_src>
import jax
import jax.numpy as jnp
from jax.experimental import pallas as pl
from jax.experimental.pallas import tpu as pltpu


def _multiberts_head_kernel(pooled_ref, sr0_ref, mask_ref, labels_ref,
                            v_ref, b_sp_ref, loss_ref, logits_ref):
    pooled = pooled_ref[...]                      # (B, S, H) f32  BERT pooler outputs
    sr0 = sr0_ref[...]                            # (B, S)    f32  NSP "is-next" logit
    mask = mask_ref[...]                          # (B, S)    f32  sentence mask
    labels = labels_ref[...]                      # (B, 1)    f32
    v = v_ref[...]                                # (1, H)    f32  folded w_sp @ W_t
    bias = b_sp_ref[0]                            # scalar    f32  sp_linear bias (SMEM)

    # ---- masked softmax over sentences (f32, VPU/XLU) ----
    scores = sr0 + (1.0 - mask) * (-10000.0)
    m = jnp.max(scores, axis=1, keepdims=True)
    e = jnp.exp(scores - m)
    weight = e / jnp.sum(e, axis=1, keepdims=True)           # (B, S)

    # ---- per-sentence folded score: z_{b,s} = <pooled_{b,s,:}, v> ----
    z = jnp.sum(pooled * v[None, :, :], axis=-1)              # (B, S), lane reduce

    # ---- weighted aggregate + bias -> logits (B, 1) ----
    logits = jnp.sum(weight * z, axis=1, keepdims=True) + bias
    logits_ref[...] = logits

    # ---- BCEWithLogitsLoss (mean reduction), numerically stable ----
    x = logits
    y = labels
    loss_elems = jnp.maximum(x, 0.0) - x * y + jnp.log1p(jnp.exp(-jnp.abs(x)))
    loss_ref[...] = jnp.mean(loss_elems).reshape(1, 1)


def fold_head_params(w_transform, w_sp):
    """Fold sp_linear weight into the transform: v = w_sp @ W_t, shape (1, H).

    Exact in real arithmetic because transform has no bias.  Do this ONCE at
    parameter-load time (outside the per-call jit), never per step.
    """
    return (w_sp.astype(jnp.float32) @ w_transform.astype(jnp.float32))


def multiberts_head_forward(pooled, sr_scores, sentence_mask, labels,
                            v_combined, b_sp):
    """Returns (loss[1,1], logits[B,1]).

    pooled:        (B, S, H) f32   BERT pooler_output per sentence
    sr_scores:     (B, S, 2) f32   BertNSP logits (only column 0 is used)
    sentence_mask: (B, S)    f32
    labels:        (B, 1)    f32
    v_combined:    (1, H)    f32   fold_head_params(w_transform, w_sp)
    b_sp:          (1,)      f32   sp_linear bias
    """
    B, S, H = pooled.shape
    # Slice in the wrapper so the unused "not-next" NSP logit is never DMA'd
    # and the kernel's VMEM buffer is a plain lane-dense (B, S) f32.
    sr0 = sr_scores[..., 0]

    vmem = pl.BlockSpec(memory_space=pltpu.MemorySpace.VMEM)
    smem = pl.BlockSpec(memory_space=pltpu.MemorySpace.SMEM)

    bytes_accessed = 4 * (B * S * H          # pooled
                          + 2 * B * S        # sr0 + mask
                          + B                # labels
                          + H + 1            # v + bias
                          + B + 1)           # logits + loss outputs
    cost = pl.CostEstimate(
        flops=2 * B * S * H + 16 * B * S + 16 * B,
        transcendentals=B * S + 2 * B,
        bytes_accessed=bytes_accessed,
    )

    return pl.pallas_call(
        _multiberts_head_kernel,
        out_shape=(
            jax.ShapeDtypeStruct((1, 1), jnp.float32),        # loss   (forward output)
            jax.ShapeDtypeStruct((B, 1), jnp.float32),        # logits (forward_nn output)
        ),
        in_specs=[vmem, vmem, vmem, vmem, vmem, smem],
        out_specs=(vmem, vmem),
        cost_estimate=cost,
    )(pooled, sr0, sentence_mask, labels, v_combined, b_sp)


def _reference(pooled, sr_scores, sentence_mask, labels, w_t, w_sp, b_sp):
    # Original PyTorch order: transform -> masked softmax -> weighted aggregate
    # -> sp_linear -> BCEWithLogits (mean).
    transformed = jnp.einsum('bsh,oh->bso', pooled, w_t)
    scores = sr_scores[:, :, 0] + (1.0 - sentence_mask) * (-10000.0)
    weight = jax.nn.softmax(scores, axis=1)
    agg = jnp.einsum('bs,bsh->bh', weight, transformed)
    logits = agg @ w_sp.T + b_sp[0]
    loss = jnp.mean(jnp.maximum(logits, 0.0) - logits * labels
                    + jnp.log1p(jnp.exp(-jnp.abs(logits))))
    return loss, logits


if __name__ == "__main__":
    B, S, H = 2, 3, 768   # batch=2, number_of_sentence=3, BERT hidden=768
    key = jax.random.PRNGKey(0)
    k1, k2, k3, k4, k5 = jax.random.split(key, 5)

    # Synthetic stand-ins for the BERT / BERT-NSP encoder outputs.
    pooled = jax.random.normal(k1, (B, S, H), jnp.float32)       # pooler_output
    sr_scores = jax.random.normal(k2, (B, S, 2), jnp.float32)    # NSP logits
    sentence_mask = jnp.array([[1., 1., 1.],
                               [1., 1., 0.]], jnp.float32)
    labels = jnp.array([[1.], [0.]], jnp.float32)

    # Parameters (shapes per __init__).
    w_transform = jax.random.normal(k3, (H, H), jnp.float32) / jnp.sqrt(H)  # Linear(768,768,bias=False)
    w_sp = jax.random.normal(k4, (1, H), jnp.float32) / jnp.sqrt(H)         # Linear(768,1).weight
    b_sp = jax.random.normal(k5, (1,), jnp.float32) * 0.01                  # Linear(768,1).bias

    # One-time parameter fold (param-load time, outside the per-call jit).
    v_combined = fold_head_params(w_transform, w_sp)             # (1, H)
    v_combined = jax.block_until_ready(v_combined)

    loss, logits = jax.jit(multiberts_head_forward)(
        pooled, sr_scores, sentence_mask, labels, v_combined, b_sp)
    jax.block_until_ready((loss, logits))

    ref_loss, ref_logits = _reference(
        pooled, sr_scores, sentence_mask, labels, w_transform, w_sp, b_sp)
    assert jnp.allclose(logits, ref_logits, rtol=1e-3, atol=1e-3), (logits, ref_logits)
    assert jnp.allclose(loss[0, 0], ref_loss, rtol=1e-3, atol=1e-3), (loss, ref_loss)

    print("KERNEL_OK")
</pallas_src>

<mosaic_0001>
module attributes {stable_mosaic.version = 11 : i64} {
  func.func @_multiberts_head_kernel(%arg0: memref<2x3x768xf32, #tpu.memory_space<vmem>>, %arg1: memref<2x3xf32, #tpu.memory_space<vmem>>, %arg2: memref<2x3xf32, #tpu.memory_space<vmem>>, %arg3: memref<2x1xf32, #tpu.memory_space<vmem>>, %arg4: memref<1x768xf32, #tpu.memory_space<vmem>>, %arg5: memref<1xf32, #tpu.memory_space<smem>>, %arg6: memref<1x1xf32, #tpu.memory_space<vmem>>, %arg7: memref<2x1xf32, #tpu.memory_space<vmem>>) attributes {dimension_semantics = [], scalar_prefetch = 0 : i64, scratch_operands = 0 : i64, tpu.core_type = #tpu.core_type<tc>} {
    %c0 = arith.constant 0 : index
    %c0_0 = arith.constant 0 : index
    %c0_1 = arith.constant 0 : index
    %0 = vector.load %arg0[%c0, %c0_0, %c0_1] : memref<2x3x768xf32, #tpu.memory_space<vmem>>, vector<2x3x768xf32>
    %c0_2 = arith.constant 0 : index
    %c0_3 = arith.constant 0 : index
    %1 = vector.load %arg1[%c0_2, %c0_3] : memref<2x3xf32, #tpu.memory_space<vmem>>, vector<2x3xf32>
    %c0_4 = arith.constant 0 : index
    %c0_5 = arith.constant 0 : index
    %2 = vector.load %arg2[%c0_4, %c0_5] : memref<2x3xf32, #tpu.memory_space<vmem>>, vector<2x3xf32>
    %c0_6 = arith.constant 0 : index
    %c0_7 = arith.constant 0 : index
    %3 = vector.load %arg3[%c0_6, %c0_7] : memref<2x1xf32, #tpu.memory_space<vmem>>, vector<2x1xf32>
    %c0_8 = arith.constant 0 : index
    %c0_9 = arith.constant 0 : index
    %4 = vector.load %arg4[%c0_8, %c0_9] : memref<1x768xf32, #tpu.memory_space<vmem>>, vector<1x768xf32>
    %c0_10 = arith.constant 0 : index
    %5 = memref.load %arg5[%c0_10] : memref<1xf32, #tpu.memory_space<smem>>
    %cst = arith.constant 1.000000e+00 : f32
    %6 = vector.broadcast %cst : f32 to vector<2x3xf32>
    %7 = arith.subf %6, %2 : vector<2x3xf32>
    %cst_11 = arith.constant -1.000000e+04 : f32
    %8 = vector.broadcast %cst_11 : f32 to vector<2x3xf32>
    %9 = arith.mulf %7, %8 : vector<2x3xf32>
    %10 = arith.addf %1, %9 : vector<2x3xf32>
    %cst_12 = arith.constant dense<0xFF800000> : vector<2xf32>
    %11 = vector.multi_reduction <maximumf>, %10, %cst_12 [1] : vector<2x3xf32> to vector<2xf32>
    %12 = vector.shape_cast %11 : vector<2xf32> to vector<2x1xf32>
    %13 = vector.broadcast %12 : vector<2x1xf32> to vector<2x3xf32>
    %14 = arith.subf %10, %13 : vector<2x3xf32>
    %15 = math.exp %14 : vector<2x3xf32>
    %cst_13 = arith.constant dense<0.000000e+00> : vector<2xf32>
    %16 = vector.multi_reduction <add>, %15, %cst_13 [1] : vector<2x3xf32> to vector<2xf32>
    %17 = vector.shape_cast %16 : vector<2xf32> to vector<2x1xf32>
    %18 = vector.broadcast %17 : vector<2x1xf32> to vector<2x3xf32>
    %19 = arith.divf %15, %18 : vector<2x3xf32>
    %20 = vector.shape_cast %4 : vector<1x768xf32> to vector<1x1x768xf32>
    %21 = vector.broadcast %20 : vector<1x1x768xf32> to vector<2x3x768xf32>
    %22 = arith.mulf %0, %21 : vector<2x3x768xf32>
    %cst_14 = arith.constant dense<0.000000e+00> : vector<2x3xf32>
    %23 = vector.multi_reduction <add>, %22, %cst_14 [2] : vector<2x3x768xf32> to vector<2x3xf32>
    %24 = arith.mulf %19, %23 : vector<2x3xf32>
    %cst_15 = arith.constant dense<0.000000e+00> : vector<2xf32>
    %25 = vector.multi_reduction <add>, %24, %cst_15 [1] : vector<2x3xf32> to vector<2xf32>
    %26 = vector.shape_cast %25 : vector<2xf32> to vector<2x1xf32>
    %27 = vector.broadcast %5 : f32 to vector<2x1xf32>
    %28 = arith.addf %26, %27 : vector<2x1xf32>
    %c0_16 = arith.constant 0 : index
    %c0_17 = arith.constant 0 : index
    %29 = vector.load %arg7[%c0_16, %c0_17] : memref<2x1xf32, #tpu.memory_space<vmem>>, vector<2x1xf32>
    tpu.vector_store %arg7[%c0_16, %c0_17], %28 {strides = array<i32>} : memref<2x1xf32, #tpu.memory_space<vmem>>, vector<2x1xf32>,
    %cst_18 = arith.constant 0.000000e+00 : f32
    %30 = vector.broadcast %cst_18 : f32 to vector<2x1xf32>
    %31 = arith.maximumf %28, %30 : vector<2x1xf32>
    %32 = arith.mulf %28, %3 : vector<2x1xf32>
    %33 = arith.subf %31, %32 : vector<2x1xf32>
    %34 = math.absf %28 : vector<2x1xf32>
    %cst_19 = arith.constant 0.000000e+00 : f32
    %35 = vector.broadcast %cst_19 : f32 to vector<2x1xf32>
    %36 = arith.subf %35, %34 : vector<2x1xf32>
    %37 = math.exp %36 : vector<2x1xf32>
    %38 = math.log1p %37 : vector<2x1xf32>
    %39 = arith.addf %33, %38 : vector<2x1xf32>
    %40 = vector.shape_cast %39 : vector<2x1xf32> to vector<1x2x1xf32>
    %cst_20 = arith.constant dense<0.000000e+00> : vector<1xf32>
    %41 = vector.multi_reduction <add>, %40, %cst_20 [1, 2] : vector<1x2x1xf32> to vector<1xf32>
    %42 = vector.shape_cast %41 : vector<1xf32> to vector<1x1x1xf32>
    %43 = vector.extract %42[0, 0, 0] : f32 from vector<1x1x1xf32>
    %cst_21 = arith.constant 2.000000e+00 : f32
    %44 = arith.divf %43, %cst_21 : f32
    %45 = vector.broadcast %44 : f32 to vector<1x1xf32>
    %c0_22 = arith.constant 0 : index
    %c0_23 = arith.constant 0 : index
    %46 = vector.load %arg6[%c0_22, %c0_23] : memref<1x1xf32, #tpu.memory_space<vmem>>, vector<1x1xf32>
    tpu.vector_store %arg6[%c0_22, %c0_23], %45 {strides = array<i32>} : memref<1x1xf32, #tpu.memory_space<vmem>>, vector<1x1xf32>,
    return
  }
}

</mosaic_0001>

<llo_original>
// kernel: multiberts_head_forward.1
$region0: #{multiberts_head_forward.1}
  #allocation0 [shape = 'u32[]', space=smem, size = 0x4, offset = 0x4, fixed_abs, tag = 'smem constant byte address 0x4 - core index']
  #allocation1 [shape = 'u32[144,128]{1,0:T(1,128)}', space=vmem, size = 0x12000, scoped, tag = 'internal scratch']
  #allocation2 [shape = 'f32[1]{0:T(128)S(6)}', space=smem, size = 0x200, scoped, tag = 'scoped memory for multiberts_head_forward.1']
  %s0 = inlined_call_operand.vmem [shape: f32[2,3,768], index: 0, kind: input, shape index: {}]
  %s1 = inlined_call_operand.vmem [shape: f32[2,3], index: 1, kind: input, shape index: {}]
  %s2 = inlined_call_operand.vmem [shape: f32[2,3], index: 2, kind: input, shape index: {}]
  %s3 = inlined_call_operand.vmem [shape: f32[2,1], index: 3, kind: input, shape index: {}]
  %s4 = inlined_call_operand.vmem [shape: f32[1,768], index: 4, kind: input, shape index: {}]
  %s5 = inlined_call_operand.<no memory space> [shape: f32[1], index: 5, kind: input, shape index: {}]
  %s6 = inlined_call_operand.hbm [shape: f32[1,1], index: 6, kind: output, shape index: {0}]
  %s7 = inlined_call_operand.vmem [shape: f32[2,1], index: 7, kind: output, shape index: {1}]
  %8 = xla_tuple %s6, %s7
  %s9 = sld [smem:[#allocation0]]
  $region42: #{multiberts_head_forward.1} parent=0
    _
  %s11 = ssub.s32 1, %s9
  %s12 = scalar_select 0, %s11, %s9
  %13 = sst [smem:[#allocation2]] %s5
  $region1: #{multiberts_head_forward.1} parent=0
    #allocation3 [shape = 'u8[512]{0}', space=vmem, size = 0x400, scoped, tag = 'output window, operand 0, single buffered']
    #allocation4 [shape = 's32[1]{0}', space=sflag, size = 0x4, scoped, tag = 'scoped memory for multiberts_head_forward.1']
    %14 = vsyncpa [#allocation4], 0
    // Predicated region
    $region2: #{multiberts_head_forward.1} parent=1 // pred_check
      _
    $region3: #{multiberts_head_forward.1} parent=1 // pred_check_branch
      %16 = sbr.rel (0) target = $region5
    $region4: #{multiberts_head_forward.1} parent=1 // pred_region
      _
    $region5: #{multiberts_head_forward.1} parent=1 // pred_fallthru
      _
    // Predicated region
    $region6: #{multiberts_head_forward.1} parent=1 // pred_check
      _
    $region7: #{multiberts_head_forward.1} parent=1 // pred_check_branch
      %18 = sbr.rel (0) target = $region9
    $region8: #{multiberts_head_forward.1} parent=1 // pred_region
      _
    $region9: #{multiberts_head_forward.1} parent=1 // pred_fallthru
      _
    // Predicated region
    $region10: #{multiberts_head_forward.1} parent=1 // pred_check
      _
    $region11: #{multiberts_head_forward.1} parent=1 // pred_check_branch
      %20 = sbr.rel (0) target = $region13
    $region12: #{multiberts_head_forward.1} parent=1 // pred_region
      _
    $region13: #{multiberts_head_forward.1} parent=1 // pred_fallthru
      _
    // Predicated region
    $region14: #{multiberts_head_forward.1} parent=1 // pred_check
      _
    $region15: #{multiberts_head_forward.1} parent=1 // pred_check_branch
      %22 = sbr.rel (0) target = $region17
    $region16: #{multiberts_head_forward.1} parent=1 // pred_region
      _
    $region17: #{multiberts_head_forward.1} parent=1 // pred_fallthru
      _
    // Predicated region
    $region18: #{multiberts_head_forward.1} parent=1 // pred_check
      _
    $region19: #{multiberts_head_forward.1} parent=1 // pred_check_branch
      %24 = sbr.rel (0) target = $region21
    $region20: #{multiberts_head_forward.1} parent=1 // pred_region
      _
    $region21: #{multiberts_head_forward.1} parent=1 // pred_fallthru
      _
    // Predicated region
    $region22: #{multiberts_head_forward.1} parent=1 // pred_check
      _
    $region23: #{multiberts_head_forward.1} parent=1 // pred_check_branch
      %26 = sbr.rel (0) target = $region25
    $region24: #{multiberts_head_forward.1} parent=1 // pred_region
      _
    $region25: #{multiberts_head_forward.1} parent=1 // pred_fallthru
      _
    %v27 = vld [vmem:[%s0] sm:$0x77]
    %v28 = vld [vmem:[%s0 + $0x8] sm:$0x77]
    %v29 = vld [vmem:[%s0 + $0x10] sm:$0x77]
    %v30 = vld [vmem:[%s0 + $0x18] sm:$0x77]
    %v31 = vld [vmem:[%s0 + $0x20] sm:$0x77]
    %v32 = vld [vmem:[%s0 + $0x28] sm:$0x77]
    %v33 = vld [vmem:[%s1] sm:$0x3]
    %v34 = vld [vmem:[%s2] sm:$0x3]
    %v35 = vld [vmem:[%s3] sm:$0x3]
    %v36 = vld [vmem:[%s4] sm:$0x3f]
    %s37 = sld [smem:[#allocation2]]
    %v38 = vsub.f32 1.0, %v34
    %v39 = vmul.f32 %v38, -10000.0
    %v40 = vadd.f32 %v33, %v39
    %vm41 = vcmask 17408
    %v42 = vsel %vm41, %v40, -inf
    %43 = vmax.xlane.f32.xlu0 %v42
    %v44 = vpop.xlane.xlu0 %43
    %v45 = vsub.f32 %v40, %v44
    %v46 = vmul.f32 %v45, 1.442695
    %v47 = vpow.pop %v46
    %v48 = vsel %vm41, %v47, 0.0
    %49 = vadd.xlane.f32.xlu0 %v48
    %v50 = vpop.xlane.xlu0 %49
    %v51 = vrcp.pop %v50
    %v52 = vmul.f32 %v47, %v51
    %v54 = vlaneseq
    %v55 = vshrl.u32 %v54, 7
    %v56 = vsub.s32 0, %v55
    %v57 = vrot.slane %v36, %v56
    %v58 = vlaneseq
    %v59 = vshrl.u32 %v58, 7
    %v60 = vsub.s32 1, %v59
    %v61 = vrot.slane %v36, %v60
    %v62 = vlaneseq
    %v63 = vshrl.u32 %v62, 7
    %v64 = vsub.s32 2, %v63
    %v65 = vrot.slane %v36, %v64
    %v66 = vlaneseq
    %v67 = vshrl.u32 %v66, 7
    %v68 = vsub.s32 3, %v67
    %v69 = vrot.slane %v36, %v68
    %v70 = vlaneseq
    %v71 = vshrl.u32 %v70, 7
    %v72 = vsub.s32 4, %v71
    %v73 = vrot.slane %v36, %v72
    %v74 = vlaneseq
    %v75 = vshrl.u32 %v74, 7
    %v76 = vsub.s32 5, %v75
    %v77 = vrot.slane %v36, %v76
    %v78 = vcombine.low %v57, %v61
    %v79 = vcombine.low %v65, %v69
    %v80 = vcombine.low %v73, %v77
    %v84 = vmul.f32 %v27, %v78
    %v85 = vmul.f32 %v28, %v79
    %v86 = vmul.f32 %v29, %v80
    %v87 = vmul.f32 %v30, %v78
    %v88 = vmul.f32 %v31, %v79
    %v89 = vmul.f32 %v32, %v80
    %v96 = vcombine.high %v84, %v84
    %v97 = vcombine.high %v85, %v85
    %v98 = vcombine.high %v86, %v86
    %v99 = vcombine.high %v87, %v87
    %v100 = vcombine.high %v88, %v88
    %v101 = vcombine.high %v89, %v89
    %vm108 = vcmask 1042432
    %v109 = vsel %vm108, %v84, 0.0
    %v110 = vsel %vm108, %v96, 0.0
    %v111 = vadd.f32 %v109, %v110
    %v112 = vsel %vm108, %v85, 0.0
    %v113 = vadd.f32 %v111, %v112
    %v114 = vsel %vm108, %v97, 0.0
    %v115 = vadd.f32 %v113, %v114
    %v116 = vsel %vm108, %v86, 0.0
    %v117 = vadd.f32 %v115, %v116
    %v118 = vsel %vm108, %v98, 0.0
    %v119 = vadd.f32 %v117, %v118
    %120 = vadd.xlane.f32.xlu0 %v119
    %v121 = vpop.xlane.xlu0 %120
    %v122 = vsel %vm108, %v87, 0.0
    %v123 = vsel %vm108, %v99, 0.0
    %v124 = vadd.f32 %v122, %v123
    %v125 = vsel %vm108, %v88, 0.0
    %v126 = vadd.f32 %v124, %v125
    %v127 = vsel %vm108, %v100, 0.0
    %v128 = vadd.f32 %v126, %v127
    %v129 = vsel %vm108, %v89, 0.0
    %v130 = vadd.f32 %v128, %v129
    %v131 = vsel %vm108, %v101, 0.0
    %v132 = vadd.f32 %v130, %v131
    %133 = vadd.xlane.f32.xlu0 %v132
    %v134 = vpop.xlane.xlu0 %133
    %v137 = vlaneseq
    %v138 = vand.u32 %v137, 127
    %v139 = vlaneseq
    %v140 = vshrl.u32 %v139, 7
    %v141 = vsub.s32 %v138, %v140
    %v142 = vrot.slane %v121, %v141
    %v143 = vlaneseq
    %v144 = vshrl.u32 %v143, 7
    %v145 = vsub.s32 %v138, %v144
    %v146 = vrot.slane %v134, %v145
    %vm147 = vcmask 1041409
    %v148 = vsel %vm147, %v146, %v142
    %v150 = vmul.f32 %v52, %v148
    %v151 = vsel %vm41, %v150, 0.0
    %152 = vadd.xlane.f32.xlu0 %v151
    %v153 = vpop.xlane.xlu0 %152
    %v154 = vstv %s37
    %v155 = vadd.f32 %v153, %v154
    %vm156 = vcmask 1024
    %157 = vst.msk [vmem:[%s7] sm:$0x3] %vm156, %v155
    %v158 = vmax.f32 %v155, 0.0
    %v159 = vmul.f32 %v155, %v35
    %v160 = vsub.f32 %v158, %v159
    %v161 = vand.u32 2147483647, %v155
    %v162 = vsub.f32 0.0, %v161
    %v163 = vmul.f32 %v162, 1.442695
    %v164 = vpow.pop %v163
    %v165 = vadd.f32 %v164, 1.0
    %v166 = vlog2.pop %v165
    %v167 = vmul.f32 %v166, 0.6931472
    %v168 = vmul.f32 -0.5, %v164
    %v169 = vadd.f32 %v168, 1.0
    %v170 = vmul.f32 %v169, %v164
    %v171 = vand.u32 2147483647, %v164
    %vm172 = vcmp.lt.f32.partialorder %v171, 0.0004427343
    %v173 = vsel %vm172, %v170, %v167
    %v174 = vadd.f32 %v160, %v173
    %v175 = vsel %vm156, %v174, 0.0
    %176 = vadd.xlane.f32.xlu0 %v175
    %v177 = vpop.xlane.xlu0 %176
    %v178 = vrot.slane %v177, 4
    %v179 = vadd.f32 %v177, %v178
    %v180 = vrot.slane %v179, 2
    %v181 = vadd.f32 %v179, %v180
    %v182 = vrot.slane %v181, 1
    %v183 = vadd.f32 %v181, %v182
    %s184 = vtos %v183
    %v185 = vrcp.pop 2.0
    %s186 = vtos %v185
    %s187 = smul.f32 %s184, %s186
    %v188 = vstv %s187
    %vm189 = vcmask 0
    %190 = vst.msk [vmem:[#allocation3] sm:$0x1] %vm189, %v188
    // Predicated region
    $region26: #{multiberts_head_forward.1} parent=1 // pred_check
      _
    $region27: #{multiberts_head_forward.1} parent=1 // pred_check_branch
      %192 = sbr.rel (0) target = $region29
    $region28: #{multiberts_head_forward.1} parent=1 // pred_region
      %s194 = ssub.s32 16, 16
      %195 = vsyncadd [#allocation4], %s194
      %s197 = sshll.u32 [#allocation3], 4
      %s198 = int_to_ptr.vmem [resolvable:$true] %s197
      %200 = dma.vmem_to_hbm [thread:$0]  %s198, 16, %s6, [#allocation4]
    $region29: #{multiberts_head_forward.1} parent=1 // pred_fallthru
      _
    // Predicated region
    $region30: #{multiberts_head_forward.1} parent=1 // pred_check
      _
    $region31: #{multiberts_head_forward.1} parent=1 // pred_check_branch
      %202 = sbr.rel (0) target = $region33
    $region32: #{multiberts_head_forward.1} parent=1 // pred_region
      _
    $region33: #{multiberts_head_forward.1} parent=1 // pred_fallthru
      _
    // Predicated region
    $region34: #{multiberts_head_forward.1} parent=1 // pred_check
      _
    $region35: #{multiberts_head_forward.1} parent=1 // pred_check_branch
      %204 = sbr.rel (0) target = $region37
    $region36: #{multiberts_head_forward.1} parent=1 // pred_region
      %205 = dma.done [#allocation4], 16
    $region37: #{multiberts_head_forward.1} parent=1 // pred_fallthru
      _
    // Predicated region
    $region38: #{multiberts_head_forward.1} parent=1 // pred_check
      _
    $region39: #{multiberts_head_forward.1} parent=1 // pred_check_branch
      %207 = sbr.rel (0) target = $region41
    $region40: #{multiberts_head_forward.1} parent=1 // pred_region
      _
    $region41: #{multiberts_head_forward.1} parent=1 // pred_fallthru
      _
    %208 = vsyncpa [#allocation4], 1

</llo_original>
